<compile_context>
chip_gen: v7x
topology: tpu7x:2x2x1
jax: 0.10.0
libtpu: 0.0.40
codegen_flags: <defaults>
</compile_context>

<pallas_src>
import functools

import jax
import jax.numpy as jnp
from jax.experimental import pallas as pl
from jax.experimental.pallas import tpu as pltpu


def _round_up(n, m):
    return ((n + m - 1) // m) * m


def policy3_kernel(x_ref, w1_ref, b1_ref, w2_ref, b2_ref,
                   w3_ref, b3_ref, w4_ref, b4_ref, o_ref, *, mm_dtype):
    # (tb, D) tile -> (D, tb): one in-kernel transpose puts the batch tile on the
    # 128-lane axis for every downstream op (XLU work, overlaps with MXU/DMA).
    xt = x_ref[...].astype(mm_dtype).T                                  # (D, tb)

    def dense(w_ref, b_ref, a):
        # W:(out,in) @ a:(in,tb) -> (out,tb); f32 accumulation on the MXU.
        h = jnp.dot(w_ref[...], a.astype(mm_dtype),
                    preferred_element_type=jnp.float32)
        return h + b_ref[...]                                           # (out,1) lane-broadcast

    h = jnp.maximum(dense(w1_ref, b1_ref, xt), 0.0)                     # (H1,  tb)
    h = jnp.maximum(dense(w2_ref, b2_ref, h), 0.0)                      # (128, tb)
    h = jnp.maximum(dense(w3_ref, b3_ref, h), 0.0)                      # (32,  tb)
    # Sigmoid: exp/recip run on the EUP slot; lane-dense (O, tb) store.
    o_ref[...] = jax.nn.sigmoid(dense(w4_ref, b4_ref, h))               # (O,   tb)


@functools.partial(jax.jit, static_argnames=("tile_b", "use_bf16"))
def policy3_forward(x, params, *, tile_b=4096, use_bf16=False):
    w1, b1, w2, b2, w3, b3, w4, b4 = params
    B, D = x.shape
    H1, H2, H3, O = w1.shape[0], w2.shape[0], w3.shape[0], w4.shape[0]

    mm_dtype = jnp.bfloat16 if use_bf16 else jnp.float32
    if use_bf16:
        w1, w2, w3, w4 = (w.astype(jnp.bfloat16) for w in (w1, w2, w3, w4))

    # --- batch tile selection (all static Python ints under jit) -------------
    tile_b = max(128, _round_up(int(tile_b), 128))      # defensive lane alignment
    tile_b = min(tile_b, 8192)                          # VMEM headroom incl. v7x (64 MiB phys)
    tb = min(tile_b, _round_up(pl.cdiv(B, 4), 128))     # >=4 "parallel" steps -> 2-TC split on v7x
    if tb >= B:
        tb = B                                          # single full block; no ragged masking needed
    grid = (pl.cdiv(B, tb),)                            # ragged last block handled by Pallas (no pad)

    param_arrays = (w1, b1, w2, b2, w3, b3, w4, b4)
    param_bytes = sum(int(a.size) * int(a.dtype.itemsize) for a in param_arrays)
    cost = pl.CostEstimate(
        flops=2 * B * (D * H1 + H1 * H2 + H2 * H3 + H3 * O),
        transcendentals=B * O,                          # exp inside sigmoid
        bytes_accessed=int(x.size) * int(x.dtype.itemsize) + 4 * B * O + param_bytes,
    )

    def _full(shape):
        # Small parameter stays resident in VMEM; constant index_map -> fetched once.
        return pl.BlockSpec(shape, lambda i: (0, 0))

    out_t = pl.pallas_call(
        functools.partial(policy3_kernel, mm_dtype=mm_dtype),
        out_shape=jax.ShapeDtypeStruct((O, B), jnp.float32),
        grid=grid,
        in_specs=[
            pl.BlockSpec((tb, D), lambda i: (i, 0)),    # x: batch-tiled, transposed in-kernel
            _full(w1.shape), _full(b1.shape),
            _full(w2.shape), _full(b2.shape),
            _full(w3.shape), _full(b3.shape),
            _full(w4.shape), _full(b4.shape),
        ],
        out_specs=pl.BlockSpec((O, tb), lambda i: (0, i)),   # lane-dense output block
        compiler_params=pltpu.CompilerParams(
            dimension_semantics=("parallel",)),         # shards over 2 TCs on v7x
        cost_estimate=cost,
    )(x, w1, b1, w2, b2, w3, b3, w4, b4)

    return out_t.T                                      # (B, O); tiny (5,B) transpose


def init_params(key, input_size, hidden_size=32, output_size=5):
    """torch.nn.Linear-style init: uniform(-1/sqrt(fan_in), 1/sqrt(fan_in)).
    Weights stored (out_features, in_features); biases stored (out_features, 1)."""
    dims = [(hidden_size, input_size), (128, hidden_size), (32, 128),
            (output_size, 32)]
    keys = jax.random.split(key, 2 * len(dims))
    params = []
    for li, (fan_out, fan_in) in enumerate(dims):
        bound = 1.0 / (float(fan_in) ** 0.5)
        w = jax.random.uniform(keys[2 * li], (fan_out, fan_in), jnp.float32,
                               minval=-bound, maxval=bound)
        b = jax.random.uniform(keys[2 * li + 1], (fan_out, 1), jnp.float32,
                               minval=-bound, maxval=bound)
        params += [w, b]
    return tuple(params)


def _reference(x, params):
    w1, b1, w2, b2, w3, b3, w4, b4 = params
    h = jnp.maximum(x @ w1.T + b1.T, 0.0)
    h = jnp.maximum(h @ w2.T + b2.T, 0.0)
    h = jnp.maximum(h @ w3.T + b3.T, 0.0)
    return jax.nn.sigmoid(h @ w4.T + b4.T)


if __name__ == "__main__":
    B, INPUT_SIZE, HIDDEN, OUT = 8, 16, 32, 5

    key = jax.random.PRNGKey(0)
    kx, kp = jax.random.split(key)
    x = jax.random.normal(kx, (B, INPUT_SIZE), dtype=jnp.float32)
    params = init_params(kp, INPUT_SIZE, HIDDEN, OUT)

    y = policy3_forward(x, params)
    jax.block_until_ready(y)

    assert y.shape == (B, OUT) and y.dtype == jnp.float32
    assert bool(jnp.all(jnp.isfinite(y)))
    assert bool(jnp.all((y > 0.0) & (y < 1.0)))

    y_ref = _reference(x, params)
    assert bool(jnp.allclose(y, y_ref, atol=1e-5, rtol=1e-5))

    print("KERNEL_OK")
</pallas_src>

<mosaic_0001>
module attributes {stable_mosaic.version = 11 : i64} {
  func.func @policy3_kernel(%arg0: i32, %arg1: memref<8x16xf32, #tpu.memory_space<vmem>>, %arg2: memref<32x16xf32, #tpu.memory_space<vmem>>, %arg3: memref<32x1xf32, #tpu.memory_space<vmem>>, %arg4: memref<128x32xf32, #tpu.memory_space<vmem>>, %arg5: memref<128x1xf32, #tpu.memory_space<vmem>>, %arg6: memref<32x128xf32, #tpu.memory_space<vmem>>, %arg7: memref<32x1xf32, #tpu.memory_space<vmem>>, %arg8: memref<5x32xf32, #tpu.memory_space<vmem>>, %arg9: memref<5x1xf32, #tpu.memory_space<vmem>>, %arg10: memref<5x8xf32, #tpu.memory_space<vmem>>) attributes {dimension_semantics = [#tpu.dimension_semantics<parallel>], iteration_bounds = array<i64: 1>, scalar_prefetch = 0 : i64, scratch_operands = 0 : i64, tpu.core_type = #tpu.core_type<tc>, window_params = [{transform_indices = @transform_0, window_bounds = array<i64: 8, 16>}, {pipeline_mode = #tpu.pipeline_mode<synchronous>, transform_indices = @transform_1, window_bounds = array<i64: 32, 16>}, {pipeline_mode = #tpu.pipeline_mode<synchronous>, transform_indices = @transform_2, window_bounds = array<i64: 32, 1>}, {pipeline_mode = #tpu.pipeline_mode<synchronous>, transform_indices = @transform_3, window_bounds = array<i64: 128, 32>}, {pipeline_mode = #tpu.pipeline_mode<synchronous>, transform_indices = @transform_4, window_bounds = array<i64: 128, 1>}, {pipeline_mode = #tpu.pipeline_mode<synchronous>, transform_indices = @transform_5, window_bounds = array<i64: 32, 128>}, {pipeline_mode = #tpu.pipeline_mode<synchronous>, transform_indices = @transform_6, window_bounds = array<i64: 32, 1>}, {pipeline_mode = #tpu.pipeline_mode<synchronous>, transform_indices = @transform_7, window_bounds = array<i64: 5, 32>}, {pipeline_mode = #tpu.pipeline_mode<synchronous>, transform_indices = @transform_8, window_bounds = array<i64: 5, 1>}, {transform_indices = @transform_9, window_bounds = array<i64: 5, 8>}]} {
    %c0 = arith.constant 0 : index
    %c0_0 = arith.constant 0 : index
    %0 = vector.load %arg1[%c0, %c0_0] : memref<8x16xf32, #tpu.memory_space<vmem>>, vector<8x16xf32>
    %1 = tpu.transpose %0, [1, 0] : vector<8x16xf32> -> vector<16x8xf32>
    %c0_1 = arith.constant 0 : index
    %c0_2 = arith.constant 0 : index
    %2 = vector.load %arg2[%c0_1, %c0_2] : memref<32x16xf32, #tpu.memory_space<vmem>>, vector<32x16xf32>
    %cst = arith.constant dense<0.000000e+00> : vector<32x8xf32>
    %3 = tpu.matmul %2, %1, %cst {dimension_numbers = #tpu.dot_dimension_numbers<[1], [0], [0], [1], [0, 0, 1, 1], [], []>} : vector<32x16xf32>, vector<16x8xf32>, vector<32x8xf32> -> vector<32x8xf32>
    %c0_3 = arith.constant 0 : index
    %c0_4 = arith.constant 0 : index
    %4 = vector.load %arg3[%c0_3, %c0_4] : memref<32x1xf32, #tpu.memory_space<vmem>>, vector<32x1xf32>
    %5 = vector.broadcast %4 : vector<32x1xf32> to vector<32x8xf32>
    %6 = arith.addf %3, %5 : vector<32x8xf32>
    %cst_5 = arith.constant 0.000000e+00 : f32
    %7 = vector.broadcast %cst_5 : f32 to vector<32x8xf32>
    %8 = arith.maximumf %6, %7 : vector<32x8xf32>
    %c0_6 = arith.constant 0 : index
    %c0_7 = arith.constant 0 : index
    %9 = vector.load %arg4[%c0_6, %c0_7] : memref<128x32xf32, #tpu.memory_space<vmem>>, vector<128x32xf32>
    %cst_8 = arith.constant dense<0.000000e+00> : vector<128x8xf32>
    %10 = tpu.matmul %9, %8, %cst_8 {dimension_numbers = #tpu.dot_dimension_numbers<[1], [0], [0], [1], [0, 0, 1, 1], [], []>} : vector<128x32xf32>, vector<32x8xf32>, vector<128x8xf32> -> vector<128x8xf32>
    %c0_9 = arith.constant 0 : index
    %c0_10 = arith.constant 0 : index
    %11 = vector.load %arg5[%c0_9, %c0_10] : memref<128x1xf32, #tpu.memory_space<vmem>>, vector<128x1xf32>
    %12 = vector.broadcast %11 : vector<128x1xf32> to vector<128x8xf32>
    %13 = arith.addf %10, %12 : vector<128x8xf32>
    %cst_11 = arith.constant 0.000000e+00 : f32
    %14 = vector.broadcast %cst_11 : f32 to vector<128x8xf32>
    %15 = arith.maximumf %13, %14 : vector<128x8xf32>
    %c0_12 = arith.constant 0 : index
    %c0_13 = arith.constant 0 : index
    %16 = vector.load %arg6[%c0_12, %c0_13] : memref<32x128xf32, #tpu.memory_space<vmem>>, vector<32x128xf32>
    %cst_14 = arith.constant dense<0.000000e+00> : vector<32x8xf32>
    %17 = tpu.matmul %16, %15, %cst_14 {dimension_numbers = #tpu.dot_dimension_numbers<[1], [0], [0], [1], [0, 0, 1, 1], [], []>} : vector<32x128xf32>, vector<128x8xf32>, vector<32x8xf32> -> vector<32x8xf32>
    %c0_15 = arith.constant 0 : index
    %c0_16 = arith.constant 0 : index
    %18 = vector.load %arg7[%c0_15, %c0_16] : memref<32x1xf32, #tpu.memory_space<vmem>>, vector<32x1xf32>
    %19 = vector.broadcast %18 : vector<32x1xf32> to vector<32x8xf32>
    %20 = arith.addf %17, %19 : vector<32x8xf32>
    %cst_17 = arith.constant 0.000000e+00 : f32
    %21 = vector.broadcast %cst_17 : f32 to vector<32x8xf32>
    %22 = arith.maximumf %20, %21 : vector<32x8xf32>
    %c0_18 = arith.constant 0 : index
    %c0_19 = arith.constant 0 : index
    %23 = vector.load %arg8[%c0_18, %c0_19] : memref<5x32xf32, #tpu.memory_space<vmem>>, vector<5x32xf32>
    %cst_20 = arith.constant dense<0.000000e+00> : vector<5x8xf32>
    %24 = tpu.matmul %23, %22, %cst_20 {dimension_numbers = #tpu.dot_dimension_numbers<[1], [0], [0], [1], [0, 0, 1, 1], [], []>} : vector<5x32xf32>, vector<32x8xf32>, vector<5x8xf32> -> vector<5x8xf32>
    %c0_21 = arith.constant 0 : index
    %c0_22 = arith.constant 0 : index
    %25 = vector.load %arg9[%c0_21, %c0_22] : memref<5x1xf32, #tpu.memory_space<vmem>>, vector<5x1xf32>
    %26 = vector.broadcast %25 : vector<5x1xf32> to vector<5x8xf32>
    %27 = arith.addf %24, %26 : vector<5x8xf32>
    %28 = arith.negf %27 : vector<5x8xf32>
    %29 = math.exp %28 : vector<5x8xf32>
    %cst_23 = arith.constant 1.000000e+00 : f32
    %30 = vector.broadcast %cst_23 : f32 to vector<5x8xf32>
    %31 = arith.addf %30, %29 : vector<5x8xf32>
    %32 = arith.divf %30, %31 : vector<5x8xf32>
    %c0_24 = arith.constant 0 : index
    %c0_25 = arith.constant 0 : index
    %33 = vector.load %arg10[%c0_24, %c0_25] : memref<5x8xf32, #tpu.memory_space<vmem>>, vector<5x8xf32>
    tpu.vector_store %arg10[%c0_24, %c0_25], %32 {strides = array<i32>} : memref<5x8xf32, #tpu.memory_space<vmem>>, vector<5x8xf32>,
    return
  }
  func.func @transform_0(%arg0: i32) -> (i32, i32) {
    %c0_i32 = arith.constant 0 : i32
    %c0_i32_0 = arith.constant 0 : i32
    return %arg0, %c0_i32 : i32, i32
  }
  func.func @transform_1(%arg0: i32) -> (i32, i32) {
    %c0_i32 = arith.constant 0 : i32
    %c0_i32_0 = arith.constant 0 : i32
    %c0_i32_1 = arith.constant 0 : i32
    return %c0_i32, %c0_i32_0 : i32, i32
  }
  func.func @transform_2(%arg0: i32) -> (i32, i32) {
    %c0_i32 = arith.constant 0 : i32
    %c0_i32_0 = arith.constant 0 : i32
    %c0_i32_1 = arith.constant 0 : i32
    return %c0_i32, %c0_i32_0 : i32, i32
  }
  func.func @transform_3(%arg0: i32) -> (i32, i32) {
    %c0_i32 = arith.constant 0 : i32
    %c0_i32_0 = arith.constant 0 : i32
    %c0_i32_1 = arith.constant 0 : i32
    return %c0_i32, %c0_i32_0 : i32, i32
  }
  func.func @transform_4(%arg0: i32) -> (i32, i32) {
    %c0_i32 = arith.constant 0 : i32
    %c0_i32_0 = arith.constant 0 : i32
    %c0_i32_1 = arith.constant 0 : i32
    return %c0_i32, %c0_i32_0 : i32, i32
  }
  func.func @transform_5(%arg0: i32) -> (i32, i32) {
    %c0_i32 = arith.constant 0 : i32
    %c0_i32_0 = arith.constant 0 : i32
    %c0_i32_1 = arith.constant 0 : i32
    return %c0_i32, %c0_i32_0 : i32, i32
  }
  func.func @transform_6(%arg0: i32) -> (i32, i32) {
    %c0_i32 = arith.constant 0 : i32
    %c0_i32_0 = arith.constant 0 : i32
    %c0_i32_1 = arith.constant 0 : i32
    return %c0_i32, %c0_i32_0 : i32, i32
  }
  func.func @transform_7(%arg0: i32) -> (i32, i32) {
    %c0_i32 = arith.constant 0 : i32
    %c0_i32_0 = arith.constant 0 : i32
    %c0_i32_1 = arith.constant 0 : i32
    return %c0_i32, %c0_i32_0 : i32, i32
  }
  func.func @transform_8(%arg0: i32) -> (i32, i32) {
    %c0_i32 = arith.constant 0 : i32
    %c0_i32_0 = arith.constant 0 : i32
    %c0_i32_1 = arith.constant 0 : i32
    return %c0_i32, %c0_i32_0 : i32, i32
  }
  func.func @transform_9(%arg0: i32) -> (i32, i32) {
    %c0_i32 = arith.constant 0 : i32
    %c0_i32_0 = arith.constant 0 : i32
    return %c0_i32, %arg0 : i32, i32
  }
}

</mosaic_0001>

<llo_original>
// kernel: policy3_forward.1
$region0: #{policy3_forward.1}
  #allocation0 [shape = 'u32[]', space=smem, size = 0x4, offset = 0x4, fixed_abs, tag = 'smem constant byte address 0x4 - core index']
  #allocation1 [shape = 'u32[144,128]{1,0:T(1,128)}', space=vmem, size = 0x12000, scoped, tag = 'internal scratch']
  %s0 = inlined_call_operand.vmem [shape: f32[8,16], index: 0, kind: input, shape index: {}]
  %s1 = inlined_call_operand.vmem [shape: f32[32,16], index: 1, kind: input, shape index: {}]
  %s2 = inlined_call_operand.vmem [shape: f32[32,1], index: 2, kind: input, shape index: {}]
  %s3 = inlined_call_operand.vmem [shape: f32[128,32], index: 3, kind: input, shape index: {}]
  %s4 = inlined_call_operand.vmem [shape: f32[128,1], index: 4, kind: input, shape index: {}]
  %s5 = inlined_call_operand.vmem [shape: f32[32,128], index: 5, kind: input, shape index: {}]
  %s6 = inlined_call_operand.vmem [shape: f32[32,1], index: 6, kind: input, shape index: {}]
  %s7 = inlined_call_operand.vmem [shape: f32[5,32], index: 7, kind: input, shape index: {}]
  %s8 = inlined_call_operand.vmem [shape: f32[5,1], index: 8, kind: input, shape index: {}]
  %s9 = inlined_call_operand.vmem [shape: f32[5,8], index: 9, kind: output, shape index: {}]
  %s10 = sld [smem:[#allocation0]]
  $region46: #{policy3_forward.1} parent=0
    _
  %s12 = ssub.s32 1, %s10
  %s13 = scalar_select 0, %s12, %s10
  // Predicated region
  $region2: #{policy3_forward.1} parent=0 // pred_check
    _
  $region3: #{policy3_forward.1} parent=0 // pred_check_branch
    %15 = sbr.rel (0) target = $region5
  $region4: #{policy3_forward.1} parent=0 // pred_region
    _
  $region5: #{policy3_forward.1} parent=0 // pred_fallthru
    _
  // Predicated region
  $region6: #{policy3_forward.1} parent=0 // pred_check
    _
  $region7: #{policy3_forward.1} parent=0 // pred_check_branch
    %17 = sbr.rel (0) target = $region9
  $region8: #{policy3_forward.1} parent=0 // pred_region
    _
  $region9: #{policy3_forward.1} parent=0 // pred_fallthru
    _
  // Predicated region
  $region10: #{policy3_forward.1} parent=0 // pred_check
    _
  $region11: #{policy3_forward.1} parent=0 // pred_check_branch
    %19 = sbr.rel (0) target = $region13
  $region12: #{policy3_forward.1} parent=0 // pred_region
    _
  $region13: #{policy3_forward.1} parent=0 // pred_fallthru
    _
  // Predicated region
  $region14: #{policy3_forward.1} parent=0 // pred_check
    _
  $region15: #{policy3_forward.1} parent=0 // pred_check_branch
    %21 = sbr.rel (0) target = $region17
  $region16: #{policy3_forward.1} parent=0 // pred_region
    _
  $region17: #{policy3_forward.1} parent=0 // pred_fallthru
    _
  // Predicated region
  $region18: #{policy3_forward.1} parent=0 // pred_check
    _
  $region19: #{policy3_forward.1} parent=0 // pred_check_branch
    %23 = sbr.rel (0) target = $region21
  $region20: #{policy3_forward.1} parent=0 // pred_region
    _
  $region21: #{policy3_forward.1} parent=0 // pred_fallthru
    _
  // Predicated region
  $region22: #{policy3_forward.1} parent=0 // pred_check
    _
  $region23: #{policy3_forward.1} parent=0 // pred_check_branch
    %25 = sbr.rel (0) target = $region25
  $region24: #{policy3_forward.1} parent=0 // pred_region
    _
  $region25: #{policy3_forward.1} parent=0 // pred_fallthru
    _
  // Predicated region
  $region26: #{policy3_forward.1} parent=0 // pred_check
    _
  $region27: #{policy3_forward.1} parent=0 // pred_check_branch
    %27 = sbr.rel (0) target = $region29
  $region28: #{policy3_forward.1} parent=0 // pred_region
    _
  $region29: #{policy3_forward.1} parent=0 // pred_fallthru
    _
  // Predicated region
  $region30: #{policy3_forward.1} parent=0 // pred_check
    _
  $region31: #{policy3_forward.1} parent=0 // pred_check_branch
    %29 = sbr.rel (0) target = $region33
  $region32: #{policy3_forward.1} parent=0 // pred_region
    _
  $region33: #{policy3_forward.1} parent=0 // pred_fallthru
    _
  // Predicated region
  $region34: #{policy3_forward.1} parent=0 // pred_check
    _
  $region35: #{policy3_forward.1} parent=0 // pred_check_branch
    %31 = sbr.rel (0) target = $region37
  $region36: #{policy3_forward.1} parent=0 // pred_region
    _
  $region37: #{policy3_forward.1} parent=0 // pred_fallthru
    _
  %v32 = vld [vmem:[%s0] sm:$0xff]
  %v33 = vld [vmem:[%s1] sm:$0xff]
  %v34 = vld [vmem:[%s1 + $0x8] sm:$0xff]
  %v35 = vld [vmem:[%s1 + $0x10] sm:$0xff]
  %v36 = vld [vmem:[%s1 + $0x18] sm:$0xff]
  %v37 = vld [vmem:[%s2] sm:$0xff]
  %v38 = vld [vmem:[%s2 + $0x8] sm:$0xff]
  %v39 = vld [vmem:[%s2 + $0x10] sm:$0xff]
  %v40 = vld [vmem:[%s2 + $0x18] sm:$0xff]
  %42 = vset.pattern.permute.xlu0 0
  %43 = vperm.xlu0 %42, %v37
  %v44 = vpop.permute.xlu0 %43
  %47 = vset.pattern.permute.xlu0 0
  %48 = vperm.xlu0 %47, %v38
  %v49 = vpop.permute.xlu0 %48
  %52 = vset.pattern.permute.xlu0 0
  %53 = vperm.xlu0 %52, %v39
  %v54 = vpop.permute.xlu0 %53
  %57 = vset.pattern.permute.xlu0 0
  %58 = vperm.xlu0 %57, %v40
  %v59 = vpop.permute.xlu0 %58
  %vm61 = vcmask 130048
  %v63 = vsel %vm61, %v33, 0
  %v66 = vsel %vm61, %v34, 0
  %v69 = vsel %vm61, %v35, 0
  %v72 = vsel %vm61, %v36, 0
  %v75 = vsel %vm61, %v32, 0
  %77 = vmatprep.subr.mxu0 0.0
  %78 = vmatpush1.xpose.msra.mxu0 %v75
  %79 = vmatprep.subr.mxu0 0.0
  %80 = vmatpush1.xpose.msra.mxu0 0.0
  %81 = vmatprep.subr.mxu0 0.0
  %82 = vmatpush1.xpose.msra.mxu0 0.0
  %83 = vmatprep.subr.mxu0 0.0
  %84 = vmatpush1.xpose.msra.mxu0 0.0
  %85 = vmatprep.subr.mxu0 0.0
  %86 = vmatpush1.xpose.msra.mxu0 0.0
  %87 = vmatprep.subr.mxu0 0.0
  %88 = vmatpush1.xpose.msra.mxu0 0.0
  %89 = vmatprep.subr.mxu0 0.0
  %90 = vmatpush1.xpose.msra.mxu0 0.0
  %91 = vmatprep.subr.mxu0 0.0
  %92 = vmatpush1.xpose.msra.mxu0 0.0
  %93 = vmatprep.subr.mxu0 0.0
  %94 = vmatpush1.xpose.msra.mxu0 0.0
  %95 = vmatprep.subr.mxu0 0.0
  %96 = vmatpush1.xpose.msra.mxu0 0.0
  %97 = vmatprep.subr.mxu0 0.0
  %98 = vmatpush1.xpose.msra.mxu0 0.0
  %99 = vmatprep.subr.mxu0 0.0
  %100 = vmatpush1.xpose.msra.mxu0 0.0
  %101 = vmatprep.subr.mxu0 0.0
  %102 = vmatpush1.xpose.msra.mxu0 0.0
  %103 = vmatprep.subr.mxu0 0.0
  %104 = vmatpush1.xpose.msra.mxu0 0.0
  %105 = vmatprep.subr.mxu0 0.0
  %106 = vmatpush1.xpose.msra.mxu0 0.0
  %107 = vmatprep.subr.mxu0 0.0
  %108 = vmatpush1.xpose.msra.mxu0 0.0
  %109 = vmatprep.subr.mxu0 0.0
  %110 = vmatpush1.xpose.msra.mxu0 0.0
  %111 = vmatprep.subr.mxu0 0.0
  %112 = vmatpush1.xpose.msra.mxu0 0.0
  %113 = vmatprep.subr.mxu0 0.0
  %114 = vmatpush1.xpose.msra.mxu0 0.0
  %115 = vmatprep.subr.mxu0 0.0
  %116 = vmatpush1.xpose.msra.mxu0 0.0
  %117 = vmatprep.subr.mxu0 0.0
  %118 = vmatpush1.xpose.msra.mxu0 0.0
  %119 = vmatprep.subr.mxu0 0.0
  %120 = vmatpush1.xpose.msra.mxu0 0.0
  %121 = vmatprep.subr.mxu0 0.0
  %122 = vmatpush1.xpose.msra.mxu0 0.0
  %123 = vmatprep.subr.mxu0 0.0
  %124 = vmatpush1.xpose.msra.mxu0 0.0
  %125 = vmatprep.subr.mxu0 0.0
  %126 = vmatpush1.xpose.msra.mxu0 0.0
  %127 = vmatprep.subr.mxu0 0.0
  %128 = vmatpush1.xpose.msra.mxu0 0.0
  %129 = vmatprep.subr.mxu0 0.0
  %130 = vmatpush1.xpose.msra.mxu0 0.0
  %131 = vmatprep.subr.mxu0 0.0
  %132 = vmatpush1.xpose.msra.mxu0 0.0
  %133 = vmatprep.subr.mxu0 0.0
  %134 = vmatpush1.xpose.msra.mxu0 0.0
  %135 = vmatprep.subr.mxu0 0.0
  %136 = vmatpush1.xpose.msra.mxu0 0.0
  %137 = vmatprep.subr.mxu0 0.0
  %138 = vmatpush1.xpose.msra.mxu0 0.0
  %139 = vmatprep.subr.mxu0 0.0
  %140 = vmatpush1.xpose.msra.mxu0 0.0
  %141 = vmatprep.mubr.f32.mxu0 0.0
  %142 = vmatmul.mubr.f32.gmra.mrb[0].mxu0 %v63
  %v143 = vpop.f32.mrb[0].mxu0
  %v144 = vadd.f32 %v44, %v143
  %v145 = vpop.f32.mrb[0].mxu0
  %146 = vmatprep.mubr.f32.mxu0 0.0
  %147 = vmatmul.mubr.f32.gmra.mrb[0].mxu0 %v66
  %v148 = vpop.f32.mrb[0].mxu0
  %v149 = vadd.f32 %v49, %v148
  %v150 = vpop.f32.mrb[0].mxu0
  %151 = vmatprep.mubr.f32.mxu0 0.0
  %152 = vmatmul.mubr.f32.gmra.mrb[0].mxu0 %v69
  %v153 = vpop.f32.mrb[0].mxu0
  %v154 = vadd.f32 %v54, %v153
  %v155 = vpop.f32.mrb[0].mxu0
  %156 = vmatprep.mubr.f32.mxu0 0.0
  %157 = vmatmul.mubr.f32.gmra.mrb[0].mxu0 %v72
  %v158 = vpop.f32.mrb[0].mxu0
  %v159 = vadd.f32 %v59, %v158
  %v160 = vpop.f32.mrb[0].mxu0
  %161 = vdwg.mxu0
  %v162 = vmax.f32 %v144, 0.0
  %v163 = vmax.f32 %v149, 0.0
  %v164 = vmax.f32 %v154, 0.0
  %v165 = vmax.f32 %v159, 0.0
  %v166 = vld [vmem:[%s3] sm:$0xff]
  %v167 = vld [vmem:[%s3 + $0x8] sm:$0xff]
  %v168 = vld [vmem:[%s3 + $0x10] sm:$0xff]
  %v169 = vld [vmem:[%s3 + $0x18] sm:$0xff]
  %v170 = vld [vmem:[%s3 + $0x20] sm:$0xff]
  %v171 = vld [vmem:[%s3 + $0x28] sm:$0xff]
  %v172 = vld [vmem:[%s3 + $0x30] sm:$0xff]
  %v173 = vld [vmem:[%s3 + $0x38] sm:$0xff]
  %v174 = vld [vmem:[%s3 + $0x40] sm:$0xff]
  %v175 = vld [vmem:[%s3 + $0x48] sm:$0xff]
  %v176 = vld [vmem:[%s3 + $0x50] sm:$0xff]
  %v177 = vld [vmem:[%s3 + $0x58] sm:$0xff]
  %v178 = vld [vmem:[%s3 + $0x60] sm:$0xff]
  %v179 = vld [vmem:[%s3 + $0x68] sm:$0xff]
  %v180 = vld [vmem:[%s3 + $0x70] sm:$0xff]
  %v181 = vld [vmem:[%s3 + $0x78] sm:$0xff]
  %v182 = vld [vmem:[%s4] sm:$0xff]
  %v183 = vld [vmem:[%s4 + $0x8] sm:$0xff]
  %v184 = vld [vmem:[%s4 + $0x10] sm:$0xff]
  %v185 = vld [vmem:[%s4 + $0x18] sm:$0xff]
  %v186 = vld [vmem:[%s4 + $0x20] sm:$0xff]
  %v187 = vld [vmem:[%s4 + $0x28] sm:$0xff]
  %v188 = vld [vmem:[%s4 + $0x30] sm:$0xff]
  %v189 = vld [vmem:[%s4 + $0x38] sm:$0xff]
  %v190 = vld [vmem:[%s4 + $0x40] sm:$0xff]
  %v191 = vld [vmem:[%s4 + $0x48] sm:$0xff]
  %v192 = vld [vmem:[%s4 + $0x50] sm:$0xff]
  %v193 = vld [vmem:[%s4 + $0x58] sm:$0xff]
  %v194 = vld [vmem:[%s4 + $0x60] sm:$0xff]
  %v195 = vld [vmem:[%s4 + $0x68] sm:$0xff]
  %v196 = vld [vmem:[%s4 + $0x70] sm:$0xff]
  %v197 = vld [vmem:[%s4 + $0x78] sm:$0xff]
  %199 = vset.pattern.permute.xlu0 0
  %200 = vperm.xlu0 %199, %v182
  %v201 = vpop.permute.xlu0 %200
  %204 = vset.pattern.permute.xlu0 0
  %205 = vperm.xlu0 %204, %v183
  %v206 = vpop.permute.xlu0 %205
  %209 = vset.pattern.permute.xlu0 0
  %210 = vperm.xlu0 %209, %v184
  %v211 = vpop.permute.xlu0 %210
  %214 = vset.pattern.permute.xlu0 0
  %215 = vperm.xlu0 %214, %v185
  %v216 = vpop.permute.xlu0 %215
  %219 = vset.pattern.permute.xlu0 0
  %220 = vperm.xlu0 %219, %v186
  %v221 = vpop.permute.xlu0 %220
  %224 = vset.pattern.permute.xlu0 0
  %225 = vperm.xlu0 %224, %v187
  %v226 = vpop.permute.xlu0 %225
  %229 = vset.pattern.permute.xlu0 0
  %230 = vperm.xlu0 %229, %v188
  %v231 = vpop.permute.xlu0 %230
  %234 = vset.pattern.permute.xlu0 0
  %235 = vperm.xlu0 %234, %v189
  %v236 = vpop.permute.xlu0 %235
  %239 = vset.pattern.permute.xlu0 0
  %240 = vperm.xlu0 %239, %v190
  %v241 = vpop.permute.xlu0 %240
  %244 = vset.pattern.permute.xlu0 0
  %245 = vperm.xlu0 %244, %v191
  %v246 = vpop.permute.xlu0 %245
  %249 = vset.pattern.permute.xlu0 0
  %250 = vperm.xlu0 %249, %v192
  %v251 = vpop.permute.xlu0 %250
  %254 = vset.pattern.permute.xlu0 0
  %255 = vperm.xlu0 %254, %v193
  %v256 = vpop.permute.xlu0 %255
  %259 = vset.pattern.permute.xlu0 0
  %260 = vperm.xlu0 %259, %v194
  %v261 = vpop.permute.xlu0 %260
  %264 = vset.pattern.permute.xlu0 0
  %265 = vperm.xlu0 %264, %v195
  %v266 = vpop.permute.xlu0 %265
  %269 = vset.pattern.permute.xlu0 0
  %270 = vperm.xlu0 %269, %v196
  %v271 = vpop.permute.xlu0 %270
  %274 = vset.pattern.permute.xlu0 0
  %275 = vperm.xlu0 %274, %v197
  %v276 = vpop.permute.xlu0 %275
  %vm278 = vcmask 261120
  %v280 = vsel %vm278, %v166, 0
  %v283 = vsel %vm278, %v167, 0
  %v286 = vsel %vm278, %v168, 0
  %v289 = vsel %vm278, %v169, 0
  %v292 = vsel %vm278, %v170, 0
  %v295 = vsel %vm278, %v171, 0
  %v298 = vsel %vm278, %v172, 0
  %v301 = vsel %vm278, %v173, 0
  %v304 = vsel %vm278, %v174, 0
  %v307 = vsel %vm278, %v175, 0
  %v310 = vsel %vm278, %v176, 0
  %v313 = vsel %vm278, %v177, 0
  %v316 = vsel %vm278, %v178, 0
  %v319 = vsel %vm278, %v179, 0
  %v322 = vsel %vm278, %v180, 0
  %v325 = vsel %vm278, %v181, 0
  %327 = vmatprep.subr.mxu0 0.0
  %328 = vmatpush1.msra.mxu0 %v162
  %329 = vmatprep.subr.mxu0 0.0
  %330 = vmatpush1.msra.mxu0 %v163
  %331 = vmatprep.subr.mxu0 0.0
  %332 = vmatpush1.msra.mxu0 %v164
  %333 = vmatprep.subr.mxu0 0.0
  %334 = vmatpush1.msra.mxu0 %v165
  %335 = vmatprep.subr.mxu0 0.0
  %336 = vmatpush1.msra.mxu0 0.0
  %337 = vmatprep.subr.mxu0 0.0
  %338 = vmatpush1.msra.mxu0 0.0
  %339 = vmatprep.subr.mxu0 0.0
  %340 = vmatpush1.msra.mxu0 0.0
  %341 = vmatprep.subr.mxu0 0.0
  %342 = vmatpush1.msra.mxu0 0.0
  %343 = vmatprep.subr.mxu0 0.0
  %344 = vmatpush1.msra.mxu0 0.0
  %345 = vmatprep.subr.mxu0 0.0
  %346 = vmatpush1.msra.mxu0 0.0
  %347 = vmatprep.subr.mxu0 0.0
  %348 = vmatpush1.msra.mxu0 0.0
  %349 = vmatprep.subr.mxu0 0.0
  %350 = vmatpush1.msra.mxu0 0.0
  %351 = vmatprep.subr.mxu0 0.0
  %352 = vmatpush1.msra.mxu0 0.0
  %353 = vmatprep.subr.mxu0 0.0
  %354 = vmatpush1.msra.mxu0 0.0
  %355 = vmatprep.subr.mxu0 0.0
  %356 = vmatpush1.msra.mxu0 0.0
  %357 = vmatprep.subr.mxu0 0.0
  %358 = vmatpush1.msra.mxu0 0.0
  %359 = vmatprep.subr.mxu0 0.0
  %360 = vmatpush1.msra.mxu0 0.0
  %361 = vmatprep.subr.mxu0 0.0
  %362 = vmatpush1.msra.mxu0 0.0
  %363 = vmatprep.subr.mxu0 0.0
  %364 = vmatpush1.msra.mxu0 0.0
  %365 = vmatprep.subr.mxu0 0.0
  %366 = vmatpush1.msra.mxu0 0.0
  %367 = vmatprep.subr.mxu0 0.0
  %368 = vmatpush1.msra.mxu0 0.0
  %369 = vmatprep.subr.mxu0 0.0
  %370 = vmatpush1.msra.mxu0 0.0
  %371 = vmatprep.subr.mxu0 0.0
  %372 = vmatpush1.msra.mxu0 0.0
  %373 = vmatprep.subr.mxu0 0.0
  %374 = vmatpush1.msra.mxu0 0.0
  %375 = vmatprep.subr.mxu0 0.0
  %376 = vmatpush1.msra.mxu0 0.0
  %377 = vmatprep.subr.mxu0 0.0
  %378 = vmatpush1.msra.mxu0 0.0
  %379 = vmatprep.subr.mxu0 0.0
  %380 = vmatpush1.msra.mxu0 0.0
  %381 = vmatprep.subr.mxu0 0.0
  %382 = vmatpush1.msra.mxu0 0.0
  %383 = vmatprep.subr.mxu0 0.0
  %384 = vmatpush1.msra.mxu0 0.0
  %385 = vmatprep.subr.mxu0 0.0
  %386 = vmatpush1.msra.mxu0 0.0
  %387 = vmatprep.subr.mxu0 0.0
  %388 = vmatpush1.msra.mxu0 0.0
  %389 = vmatprep.subr.mxu0 0.0
  %390 = vmatpush1.msra.mxu0 0.0
  %391 = vmatprep.mubr.f32.mxu0 0.0
  %392 = vmatmul.mubr.f32.gmra.mrb[0].mxu0 %v280
  %v393 = vpop.f32.mrb[0].mxu0
  %v394 = vadd.f32 %v201, %v393
  %v395 = vpop.f32.mrb[0].mxu0
  %396 = vmatprep.mubr.f32.mxu0 0.0
  %397 = vmatmul.mubr.f32.gmra.mrb[0].mxu0 %v283
  %v398 = vpop.f32.mrb[0].mxu0
  %v399 = vadd.f32 %v206, %v398
  %v400 = vpop.f32.mrb[0].mxu0
  %401 = vmatprep.mubr.f32.mxu0 0.0
  %402 = vmatmul.mubr.f32.gmra.mrb[0].mxu0 %v286
  %v403 = vpop.f32.mrb[0].mxu0
  %v404 = vadd.f32 %v211, %v403
  %v405 = vpop.f32.mrb[0].mxu0
  %406 = vmatprep.mubr.f32.mxu0 0.0
  %407 = vmatmul.mubr.f32.gmra.mrb[0].mxu0 %v289
  %v408 = vpop.f32.mrb[0].mxu0
  %v409 = vadd.f32 %v216, %v408
  %v410 = vpop.f32.mrb[0].mxu0
  %411 = vmatprep.mubr.f32.mxu0 0.0
  %412 = vmatmul.mubr.f32.gmra.mrb[0].mxu0 %v292
  %v413 = vpop.f32.mrb[0].mxu0
  %v414 = vadd.f32 %v221, %v413
  %v415 = vpop.f32.mrb[0].mxu0
  %416 = vmatprep.mubr.f32.mxu0 0.0
  %417 = vmatmul.mubr.f32.gmra.mrb[0].mxu0 %v295
  %v418 = vpop.f32.mrb[0].mxu0
  %v419 = vadd.f32 %v226, %v418
  %v420 = vpop.f32.mrb[0].mxu0
  %421 = vmatprep.mubr.f32.mxu0 0.0
  %422 = vmatmul.mubr.f32.gmra.mrb[0].mxu0 %v298
  %v423 = vpop.f32.mrb[0].mxu0
  %v424 = vadd.f32 %v231, %v423
  %v425 = vpop.f32.mrb[0].mxu0
  %426 = vmatprep.mubr.f32.mxu0 0.0
  %427 = vmatmul.mubr.f32.gmra.mrb[0].mxu0 %v301
  %v428 = vpop.f32.mrb[0].mxu0
  %v429 = vadd.f32 %v236, %v428
  %v430 = vpop.f32.mrb[0].mxu0
  %431 = vmatprep.mubr.f32.mxu0 0.0
  %432 = vmatmul.mubr.f32.gmra.mrb[0].mxu0 %v304
  %v433 = vpop.f32.mrb[0].mxu0
  %v434 = vadd.f32 %v241, %v433
  %v435 = vpop.f32.mrb[0].mxu0
  %436 = vmatprep.mubr.f32.mxu0 0.0
  %437 = vmatmul.mubr.f32.gmra.mrb[0].mxu0 %v307
  %v438 = vpop.f32.mrb[0].mxu0
  %v439 = vadd.f32 %v246, %v438
  %v440 = vpop.f32.mrb[0].mxu0
  %441 = vmatprep.mubr.f32.mxu0 0.0
  %442 = vmatmul.mubr.f32.gmra.mrb[0].mxu0 %v310
  %v443 = vpop.f32.mrb[0].mxu0
  %v444 = vadd.f32 %v251, %v443
  %v445 = vpop.f32.mrb[0].mxu0
  %446 = vmatprep.mubr.f32.mxu0 0.0
  %447 = vmatmul.mubr.f32.gmra.mrb[0].mxu0 %v313
  %v448 = vpop.f32.mrb[0].mxu0
  %v449 = vadd.f32 %v256, %v448
  %v450 = vpop.f32.mrb[0].mxu0
  %451 = vmatprep.mubr.f32.mxu0 0.0
  %452 = vmatmul.mubr.f32.gmra.mrb[0].mxu0 %v316
  %v453 = vpop.f32.mrb[0].mxu0
  %v454 = vadd.f32 %v261, %v453
  %v455 = vpop.f32.mrb[0].mxu0
  %456 = vmatprep.mubr.f32.mxu0 0.0
  %457 = vmatmul.mubr.f32.gmra.mrb[0].mxu0 %v319
  %v458 = vpop.f32.mrb[0].mxu0
  %v459 = vadd.f32 %v266, %v458
  %v460 = vpop.f32.mrb[0].mxu0
  %461 = vmatprep.mubr.f32.mxu0 0.0
  %462 = vmatmul.mubr.f32.gmra.mrb[0].mxu0 %v322
  %v463 = vpop.f32.mrb[0].mxu0
  %v464 = vadd.f32 %v271, %v463
  %v465 = vpop.f32.mrb[0].mxu0
  %466 = vmatprep.mubr.f32.mxu0 0.0
  %467 = vmatmul.mubr.f32.gmra.mrb[0].mxu0 %v325
  %v468 = vpop.f32.mrb[0].mxu0
  %v469 = vadd.f32 %v276, %v468
  %v470 = vpop.f32.mrb[0].mxu0
  %471 = vdwg.mxu0
  %v472 = vmax.f32 %v394, 0.0
  %v473 = vmax.f32 %v399, 0.0
  %v474 = vmax.f32 %v404, 0.0
  %v475 = vmax.f32 %v409, 0.0
  %v476 = vmax.f32 %v414, 0.0
  %v477 = vmax.f32 %v419, 0.0
  %v478 = vmax.f32 %v424, 0.0
  %v479 = vmax.f32 %v429, 0.0
  %v480 = vmax.f32 %v434, 0.0
  %v481 = vmax.f32 %v439, 0.0
  %v482 = vmax.f32 %v444, 0.0
  %v483 = vmax.f32 %v449, 0.0
  %v484 = vmax.f32 %v454, 0.0
  %v485 = vmax.f32 %v459, 0.0
  %v486 = vmax.f32 %v464, 0.0
  %v487 = vmax.f32 %v469, 0.0
  %v488 = vld [vmem:[%s5] sm:$0xff]
  %v489 = vld [vmem:[%s5 + $0x8] sm:$0xff]
  %v490 = vld [vmem:[%s5 + $0x10] sm:$0xff]
  %v491 = vld [vmem:[%s5 + $0x18] sm:$0xff]
  %v492 = vld [vmem:[%s6] sm:$0xff]
  %v493 = vld [vmem:[%s6 + $0x8] sm:$0xff]
  %v494 = vld [vmem:[%s6 + $0x10] sm:$0xff]
  %v495 = vld [vmem:[%s6 + $0x18] sm:$0xff]
  %497 = vset.pattern.permute.xlu0 0
  %498 = vperm.xlu0 %497, %v492
  %v499 = vpop.permute.xlu0 %498
  %502 = vset.pattern.permute.xlu0 0
  %503 = vperm.xlu0 %502, %v493
  %v504 = vpop.permute.xlu0 %503
  %507 = vset.pattern.permute.xlu0 0
  %508 = vperm.xlu0 %507, %v494
  %v509 = vpop.permute.xlu0 %508
  %512 = vset.pattern.permute.xlu0 0
  %513 = vperm.xlu0 %512, %v495
  %v514 = vpop.permute.xlu0 %513
  %516 = vmatprep.subr.mxu0 0.0
  %517 = vmatpush1.msra.mxu0 %v472
  %518 = vmatprep.subr.mxu0 0.0
  %519 = vmatpush1.msra.mxu0 %v473
  %520 = vmatprep.subr.mxu0 0.0
  %521 = vmatpush1.msra.mxu0 %v474
  %522 = vmatprep.subr.mxu0 0.0
  %523 = vmatpush1.msra.mxu0 %v475
  %524 = vmatprep.subr.mxu0 0.0
  %525 = vmatpush1.msra.mxu0 %v476
  %526 = vmatprep.subr.mxu0 0.0
  %527 = vmatpush1.msra.mxu0 %v477
  %528 = vmatprep.subr.mxu0 0.0
  %529 = vmatpush1.msra.mxu0 %v478
  %530 = vmatprep.subr.mxu0 0.0
  %531 = vmatpush1.msra.mxu0 %v479
  %532 = vmatprep.subr.mxu0 0.0
  %533 = vmatpush1.msra.mxu0 %v480
  %534 = vmatprep.subr.mxu0 0.0
  %535 = vmatpush1.msra.mxu0 %v481
  %536 = vmatprep.subr.mxu0 0.0
  %537 = vmatpush1.msra.mxu0 %v482
  %538 = vmatprep.subr.mxu0 0.0
  %539 = vmatpush1.msra.mxu0 %v483
  %540 = vmatprep.subr.mxu0 0.0
  %541 = vmatpush1.msra.mxu0 %v484
  %542 = vmatprep.subr.mxu0 0.0
  %543 = vmatpush1.msra.mxu0 %v485
  %544 = vmatprep.subr.mxu0 0.0
  %545 = vmatpush1.msra.mxu0 %v486
  %546 = vmatprep.subr.mxu0 0.0
  %547 = vmatpush1.msra.mxu0 %v487
  %548 = vmatprep.subr.mxu0 0.0
  %549 = vmatpush1.msra.mxu0 0.0
  %550 = vmatprep.subr.mxu0 0.0
  %551 = vmatpush1.msra.mxu0 0.0
  %552 = vmatprep.subr.mxu0 0.0
  %553 = vmatpush1.msra.mxu0 0.0
  %554 = vmatprep.subr.mxu0 0.0
  %555 = vmatpush1.msra.mxu0 0.0
  %556 = vmatprep.subr.mxu0 0.0
  %557 = vmatpush1.msra.mxu0 0.0
  %558 = vmatprep.subr.mxu0 0.0
  %559 = vmatpush1.msra.mxu0 0.0
  %560 = vmatprep.subr.mxu0 0.0
  %561 = vmatpush1.msra.mxu0 0.0
  %562 = vmatprep.subr.mxu0 0.0
  %563 = vmatpush1.msra.mxu0 0.0
  %564 = vmatprep.subr.mxu0 0.0
  %565 = vmatpush1.msra.mxu0 0.0
  %566 = vmatprep.subr.mxu0 0.0
  %567 = vmatpush1.msra.mxu0 0.0
  %568 = vmatprep.subr.mxu0 0.0
  %569 = vmatpush1.msra.mxu0 0.0
  %570 = vmatprep.subr.mxu0 0.0
  %571 = vmatpush1.msra.mxu0 0.0
  %572 = vmatprep.subr.mxu0 0.0
  %573 = vmatpush1.msra.mxu0 0.0
  %574 = vmatprep.subr.mxu0 0.0
  %575 = vmatpush1.msra.mxu0 0.0
  %576 = vmatprep.subr.mxu0 0.0
  %577 = vmatpush1.msra.mxu0 0.0
  %578 = vmatprep.subr.mxu0 0.0
  %579 = vmatpush1.msra.mxu0 0.0
  %580 = vmatprep.mubr.f32.mxu0 0.0
  %581 = vmatmul.mubr.f32.gmra.mrb[0].mxu0 %v488
  %v582 = vpop.f32.mrb[0].mxu0
  %v583 = vadd.f32 %v499, %v582
  %v584 = vpop.f32.mrb[0].mxu0
  %585 = vmatprep.mubr.f32.mxu0 0.0
  %586 = vmatmul.mubr.f32.gmra.mrb[0].mxu0 %v489
  %v587 = vpop.f32.mrb[0].mxu0
  %v588 = vadd.f32 %v504, %v587
  %v589 = vpop.f32.mrb[0].mxu0
  %590 = vmatprep.mubr.f32.mxu0 0.0
  %591 = vmatmul.mubr.f32.gmra.mrb[0].mxu0 %v490
  %v592 = vpop.f32.mrb[0].mxu0
  %v593 = vadd.f32 %v509, %v592
  %v594 = vpop.f32.mrb[0].mxu0
  %595 = vmatprep.mubr.f32.mxu0 0.0
  %596 = vmatmul.mubr.f32.gmra.mrb[0].mxu0 %v491
  %v597 = vpop.f32.mrb[0].mxu0
  %v598 = vadd.f32 %v514, %v597
  %v599 = vpop.f32.mrb[0].mxu0
  %600 = vdwg.mxu0
  %v601 = vmax.f32 %v583, 0.0
  %v602 = vmax.f32 %v588, 0.0
  %v603 = vmax.f32 %v593, 0.0
  %v604 = vmax.f32 %v598, 0.0
  %v605 = vld [vmem:[%s7] sm:$0x1f]
  %v606 = vld [vmem:[%s8] sm:$0x1f]
  %608 = vset.pattern.permute.xlu0 0
  %609 = vperm.xlu0 %608, %v606
  %v610 = vpop.permute.xlu0 %609
  %v613 = vsel %vm278, %v605, 0
  %615 = vmatprep.subr.mxu0 0.0
  %616 = vmatpush1.msra.mxu0 %v601
  %617 = vmatprep.subr.mxu0 0.0
  %618 = vmatpush1.msra.mxu0 %v602
  %619 = vmatprep.subr.mxu0 0.0
  %620 = vmatpush1.msra.mxu0 %v603
  %621 = vmatprep.subr.mxu0 0.0
  %622 = vmatpush1.msra.mxu0 %v604
  %623 = vmatprep.subr.mxu0 0.0
  %624 = vmatpush1.msra.mxu0 0.0
  %625 = vmatprep.subr.mxu0 0.0
  %626 = vmatpush1.msra.mxu0 0.0
  %627 = vmatprep.subr.mxu0 0.0
  %628 = vmatpush1.msra.mxu0 0.0
  %629 = vmatprep.subr.mxu0 0.0
  %630 = vmatpush1.msra.mxu0 0.0
  %631 = vmatprep.subr.mxu0 0.0
  %632 = vmatpush1.msra.mxu0 0.0
  %633 = vmatprep.subr.mxu0 0.0
  %634 = vmatpush1.msra.mxu0 0.0
  %635 = vmatprep.subr.mxu0 0.0
  %636 = vmatpush1.msra.mxu0 0.0
  %637 = vmatprep.subr.mxu0 0.0
  %638 = vmatpush1.msra.mxu0 0.0
  %639 = vmatprep.subr.mxu0 0.0
  %640 = vmatpush1.msra.mxu0 0.0
  %641 = vmatprep.subr.mxu0 0.0
  %642 = vmatpush1.msra.mxu0 0.0
  %643 = vmatprep.subr.mxu0 0.0
  %644 = vmatpush1.msra.mxu0 0.0
  %645 = vmatprep.subr.mxu0 0.0
  %646 = vmatpush1.msra.mxu0 0.0
  %647 = vmatprep.subr.mxu0 0.0
  %648 = vmatpush1.msra.mxu0 0.0
  %649 = vmatprep.subr.mxu0 0.0
  %650 = vmatpush1.msra.mxu0 0.0
  %651 = vmatprep.subr.mxu0 0.0
  %652 = vmatpush1.msra.mxu0 0.0
  %653 = vmatprep.subr.mxu0 0.0
  %654 = vmatpush1.msra.mxu0 0.0
  %655 = vmatprep.subr.mxu0 0.0
  %656 = vmatpush1.msra.mxu0 0.0
  %657 = vmatprep.subr.mxu0 0.0
  %658 = vmatpush1.msra.mxu0 0.0
  %659 = vmatprep.subr.mxu0 0.0
  %660 = vmatpush1.msra.mxu0 0.0
  %661 = vmatprep.subr.mxu0 0.0
  %662 = vmatpush1.msra.mxu0 0.0
  %663 = vmatprep.subr.mxu0 0.0
  %664 = vmatpush1.msra.mxu0 0.0
  %665 = vmatprep.subr.mxu0 0.0
  %666 = vmatpush1.msra.mxu0 0.0
  %667 = vmatprep.subr.mxu0 0.0
  %668 = vmatpush1.msra.mxu0 0.0
  %669 = vmatprep.subr.mxu0 0.0
  %670 = vmatpush1.msra.mxu0 0.0
  %671 = vmatprep.subr.mxu0 0.0
  %672 = vmatpush1.msra.mxu0 0.0
  %673 = vmatprep.subr.mxu0 0.0
  %674 = vmatpush1.msra.mxu0 0.0
  %675 = vmatprep.subr.mxu0 0.0
  %676 = vmatpush1.msra.mxu0 0.0
  %677 = vmatprep.subr.mxu0 0.0
  %678 = vmatpush1.msra.mxu0 0.0
  %679 = vmatprep.mubr.f32.mxu0 0.0
  %680 = vmatmul.mubr.f32.gmra.mrb[0].mxu0 %v613
  %v681 = vpop.f32.mrb[0].mxu0
  %v682 = vadd.f32 %v610, %v681
  %v683 = vpop.f32.mrb[0].mxu0
  %684 = vdwg.mxu0
  %v685 = vxor.u32 %v682, 2147483648
  %v686 = vmul.f32 %v685, 1.442695
  %v687 = vpow.pop %v686
  %v688 = vadd.f32 %v687, 1.0
  %v689 = vrcp.pop %v688
  %v690 = vmul.f32 1.0, %v689
  %vm691 = vcmask 61440
  %692 = vst.msk [vmem:[%s9] sm:$0x1f] %vm691, %v690
  // Predicated region
  $region38: #{policy3_forward.1} parent=0 // pred_check
    _
  $region39: #{policy3_forward.1} parent=0 // pred_check_branch
    %694 = sbr.rel (0) target = $region41
  $region40: #{policy3_forward.1} parent=0 // pred_region
    _
  $region41: #{policy3_forward.1} parent=0 // pred_fallthru
    _
  // Predicated region
  $region42: #{policy3_forward.1} parent=0 // pred_check
    _
  $region43: #{policy3_forward.1} parent=0 // pred_check_branch
    %696 = sbr.rel (0) target = $region45
  $region44: #{policy3_forward.1} parent=0 // pred_region
    _
  $region45: #{policy3_forward.1} parent=0 // pred_fallthru
    _

</llo_original>
